<compile_context>
chip_gen: v7x
topology: tpu7x:2x2x1
jax: 0.10.0
libtpu: 0.0.40
codegen_flags: <defaults>
</compile_context>

<pallas_src>
import functools
import math

import jax
import jax.numpy as jnp
from jax.experimental import pallas as pl
from jax.experimental.pallas import tpu as pltpu


def _round_up(a: int, b: int) -> int:
    return (a + b - 1) // b * b


def _srl_kernel(x_ref, w_ref, g_ref, b_ref, o_ref, *, leaky_c: float, eps: float):
    """One node-tile of fused Linear + BatchNorm(batch stats) + LeakyReLU.

    x_ref: (B, TN, Fin)   input tile (native dtype: f32 or bf16)
    w_ref: (Fin, Fout)    transposed linear weight (native dtype, resident)
    g_ref: (TN, Fout)     BN gamma tile (f32)
    b_ref: (TN, Fout)     BN beta  tile (f32)
    o_ref: (B, TN, Fout)  output tile (input dtype)
    """
    B, TN, Fin = x_ref.shape
    Fout = w_ref.shape[1]

    # ---- Linear: one (B*TN, Fin) @ (Fin, Fout) MXU matmul, f32 accumulation.
    # TN is a multiple of 8, so merging / splitting the leading dims is a free
    # (layout-preserving) relayout.  K = Fin is handled by the matmul lowering,
    # so no wrapper-side zero padding of the contraction dim is needed.
    x2 = x_ref[...].reshape(B * TN, Fin)
    y = jnp.dot(x2, w_ref[...], preferred_element_type=jnp.float32)
    y = y.reshape(B, TN, Fout)

    # ---- BatchNorm1d over the batch axis (training-mode batch statistics),
    # affine folded into scale/shift.  Single-pass variance clamped at 0 so
    # catastrophic cancellation can never feed rsqrt a negative argument.
    mean = jnp.mean(y, axis=0, keepdims=True)                     # (1, TN, Fout)
    var = jnp.mean(y * y, axis=0, keepdims=True) - mean * mean
    var = jnp.maximum(var, 0.0)
    scale = g_ref[...] * jax.lax.rsqrt(var + eps)                 # (1, TN, Fout)
    shift = b_ref[...] - mean * scale
    out = y * scale + shift

    # ---- LeakyReLU (Dropout == identity in eval mode).
    out = jnp.where(out >= 0, out, leaky_c * out)

    # ---- Single whole-block store (no per-node loop).
    o_ref[...] = out.astype(o_ref.dtype)


def single_right_linear(x, weight, bias, gamma, beta, *,
                        leaky_c: float = 0.2, eps: float = 1e-5):
    """x: (B, N, Fin); weight: (Fout, Fin); bias: (Fout,); gamma/beta: (N*Fout,).

    Returns (B, N, Fout) in x.dtype.  `bias` is accepted for interface parity but
    cancels exactly under batch-statistic BN, so it is not sent to the kernel.
    """
    del bias
    B, N, Fin = x.shape
    Fout = weight.shape[0]

    wT = weight.T.astype(x.dtype)                    # (Fin, Fout), tiny
    g2 = gamma.reshape(N, Fout).astype(jnp.float32)  # free (contiguous) reshapes
    b2 = beta.reshape(N, Fout).astype(jnp.float32)

    # Node-tile size: multiple of 8 sublanes, big enough that the matmul M dim
    # (B*TN) fills the MXU (~256 rows), small enough that the double-buffered
    # tiles stay a few hundred KiB (fits the default VMEM window on v5e/v6e/v7x).
    tn_target = _round_up(max(8, pl.cdiv(256, B)), 8)
    row_bytes = B * (Fin + Fout) * x.dtype.itemsize + 2 * Fout * 4
    tn_vmem = max(8, ((4 * 1024 * 1024) // max(1, row_bytes)) // 8 * 8)
    TN = min(tn_target, tn_vmem, _round_up(N, 8))
    if N >= 8:
        # Keep the block shape within the array bounds; only the genuine trailing
        # grid block may overhang N (an ordinary partial block, no HBM padding).
        TN = min(TN, (N // 8) * 8)
    grid = (pl.cdiv(N, TN),)

    kernel = functools.partial(_srl_kernel, leaky_c=leaky_c, eps=eps)

    return pl.pallas_call(
        kernel,
        out_shape=jax.ShapeDtypeStruct((B, N, Fout), x.dtype),
        grid=grid,
        in_specs=[
            pl.BlockSpec((B, TN, Fin), lambda i: (0, i, 0)),   # x node-tile
            pl.BlockSpec((Fin, Fout), lambda i: (0, 0)),       # W^T (resident)
            pl.BlockSpec((TN, Fout), lambda i: (i, 0)),        # gamma tile
            pl.BlockSpec((TN, Fout), lambda i: (i, 0)),        # beta tile
        ],
        out_specs=pl.BlockSpec((B, TN, Fout), lambda i: (0, i, 0)),
        compiler_params=pltpu.CompilerParams(
            dimension_semantics=("parallel",),  # independent node tiles -> 2 TCs on v7x
        ),
    )(x, wT, g2, b2)


def _reference(x, weight, bias, gamma, beta, leaky_c=0.2, eps=1e-5):
    B, N, Fin = x.shape
    Fout = weight.shape[0]
    y = jnp.einsum('bnk,fk->bnf', x, weight) + bias.reshape(1, 1, Fout)
    y2 = y.reshape(B, N * Fout)
    mean = jnp.mean(y2, axis=0, keepdims=True)
    var = jnp.mean((y2 - mean) ** 2, axis=0, keepdims=True)
    y2 = (y2 - mean) / jnp.sqrt(var + eps) * gamma + beta
    y = y2.reshape(B, N, Fout)
    return jnp.where(y >= 0, y, leaky_c * y)


def _make_params(key, Fin, Fout, N):
    kw, kb, kg, kbe = jax.random.split(key, 4)
    bound = 1.0 / math.sqrt(Fin)  # nn.Linear default init range
    weight = jax.random.uniform(kw, (Fout, Fin), minval=-bound, maxval=bound,
                                dtype=jnp.float32)
    bias = jax.random.uniform(kb, (Fout,), minval=-bound, maxval=bound,
                              dtype=jnp.float32)
    gamma = 1.0 + 0.1 * jax.random.normal(kg, (N * Fout,), dtype=jnp.float32)
    beta = 0.1 * jax.random.normal(kbe, (N * Fout,), dtype=jnp.float32)
    return weight, bias, gamma, beta


if __name__ == "__main__":
    leaky_c = 0.2
    key = jax.random.PRNGKey(0)
    k1, k2, k3, k4 = jax.random.split(key, 4)

    # --- Test 1: small shapes (B, node_n, input_feature) = (4, 10, 35), Fout = 32.
    B, N, Fin, Fout = 4, 10, 35, 32
    x = jax.random.normal(k1, (B, N, Fin), dtype=jnp.float32)
    weight, bias, gamma, beta = _make_params(k2, Fin, Fout, N)
    out = jax.block_until_ready(
        single_right_linear(x, weight, bias, gamma, beta, leaky_c=leaky_c))
    ref = _reference(x, weight, bias, gamma, beta, leaky_c=leaky_c)
    assert out.shape == (B, N, Fout)
    assert jnp.allclose(out, ref, atol=5e-4, rtol=5e-4), \
        float(jnp.max(jnp.abs(out - ref)))

    # --- Test 2: the module docstring shape (B, 66, 35) -> (B, 66, 35); exercises
    # a multi-tile grid with a trailing partial node block (no HBM-side padding).
    B2, N2, Fin2, Fout2 = 4, 66, 35, 35
    x2 = jax.random.normal(k3, (B2, N2, Fin2), dtype=jnp.float32)
    weight2, bias2, gamma2, beta2 = _make_params(k4, Fin2, Fout2, N2)
    out2 = jax.block_until_ready(
        single_right_linear(x2, weight2, bias2, gamma2, beta2, leaky_c=leaky_c))
    ref2 = _reference(x2, weight2, bias2, gamma2, beta2, leaky_c=leaky_c)
    assert out2.shape == (B2, N2, Fout2)
    assert jnp.allclose(out2, ref2, atol=5e-4, rtol=5e-4), \
        float(jnp.max(jnp.abs(out2 - ref2)))

    # --- bf16 input path: bf16 MXU matmul with f32 accumulation, bf16 output.
    out_bf16 = jax.block_until_ready(
        single_right_linear(x.astype(jnp.bfloat16), weight.astype(jnp.bfloat16),
                            bias, gamma, beta, leaky_c=leaky_c))
    assert out_bf16.shape == (B, N, Fout)
    assert out_bf16.dtype == jnp.bfloat16
    assert bool(jnp.all(jnp.isfinite(out_bf16.astype(jnp.float32))))

    print("KERNEL_OK")
</pallas_src>

<mosaic_0001>
module attributes {stable_mosaic.version = 11 : i64} {
  func.func @_srl_kernel(%arg0: i32, %arg1: memref<4x8x35xf32, #tpu.memory_space<vmem>>, %arg2: memref<35x32xf32, #tpu.memory_space<vmem>>, %arg3: memref<8x32xf32, #tpu.memory_space<vmem>>, %arg4: memref<8x32xf32, #tpu.memory_space<vmem>>, %arg5: memref<4x8x32xf32, #tpu.memory_space<vmem>>) attributes {dimension_semantics = [#tpu.dimension_semantics<parallel>], iteration_bounds = array<i64: 2>, scalar_prefetch = 0 : i64, scratch_operands = 0 : i64, tpu.core_type = #tpu.core_type<tc>, window_params = [{transform_indices = @transform_0, window_bounds = array<i64: 4, 8, 35>}, {pipeline_mode = #tpu.pipeline_mode<synchronous>, transform_indices = @transform_1, window_bounds = array<i64: 35, 32>}, {transform_indices = @transform_2, window_bounds = array<i64: 8, 32>}, {transform_indices = @transform_3, window_bounds = array<i64: 8, 32>}, {transform_indices = @transform_4, window_bounds = array<i64: 4, 8, 32>}]} {
    %c0 = arith.constant 0 : index
    %c0_0 = arith.constant 0 : index
    %c0_1 = arith.constant 0 : index
    %0 = vector.load %arg1[%c0, %c0_0, %c0_1] : memref<4x8x35xf32, #tpu.memory_space<vmem>>, vector<4x8x35xf32>
    %1 = vector.shape_cast %0 : vector<4x8x35xf32> to vector<32x35xf32>
    %c0_2 = arith.constant 0 : index
    %c0_3 = arith.constant 0 : index
    %2 = vector.load %arg2[%c0_2, %c0_3] : memref<35x32xf32, #tpu.memory_space<vmem>>, vector<35x32xf32>
    %cst = arith.constant dense<0.000000e+00> : vector<32x32xf32>
    %3 = tpu.matmul %1, %2, %cst {dimension_numbers = #tpu.dot_dimension_numbers<[1], [0], [0], [1], [0, 0, 1, 1], [], []>} : vector<32x35xf32>, vector<35x32xf32>, vector<32x32xf32> -> vector<32x32xf32>
    %4 = vector.shape_cast %3 : vector<32x32xf32> to vector<4x8x32xf32>
    %cst_4 = arith.constant dense<0.000000e+00> : vector<8x32xf32>
    %5 = vector.multi_reduction <add>, %4, %cst_4 [0] : vector<4x8x32xf32> to vector<8x32xf32>
    %6 = vector.shape_cast %5 : vector<8x32xf32> to vector<1x8x32xf32>
    %cst_5 = arith.constant 4.000000e+00 : f32
    %7 = vector.broadcast %cst_5 : f32 to vector<1x8x32xf32>
    %8 = arith.divf %6, %7 : vector<1x8x32xf32>
    %9 = arith.mulf %4, %4 : vector<4x8x32xf32>
    %cst_6 = arith.constant dense<0.000000e+00> : vector<8x32xf32>
    %10 = vector.multi_reduction <add>, %9, %cst_6 [0] : vector<4x8x32xf32> to vector<8x32xf32>
    %11 = vector.shape_cast %10 : vector<8x32xf32> to vector<1x8x32xf32>
    %cst_7 = arith.constant 4.000000e+00 : f32
    %12 = vector.broadcast %cst_7 : f32 to vector<1x8x32xf32>
    %13 = arith.divf %11, %12 : vector<1x8x32xf32>
    %14 = arith.mulf %8, %8 : vector<1x8x32xf32>
    %15 = arith.subf %13, %14 : vector<1x8x32xf32>
    %cst_8 = arith.constant 0.000000e+00 : f32
    %16 = vector.broadcast %cst_8 : f32 to vector<1x8x32xf32>
    %17 = arith.maximumf %15, %16 : vector<1x8x32xf32>
    %c0_9 = arith.constant 0 : index
    %c0_10 = arith.constant 0 : index
    %18 = vector.load %arg3[%c0_9, %c0_10] : memref<8x32xf32, #tpu.memory_space<vmem>>, vector<8x32xf32>
    %cst_11 = arith.constant 9.99999974E-6 : f32
    %19 = vector.broadcast %cst_11 : f32 to vector<1x8x32xf32>
    %20 = arith.addf %17, %19 : vector<1x8x32xf32>
    %21 = math.rsqrt %20 : vector<1x8x32xf32>
    %22 = vector.shape_cast %18 : vector<8x32xf32> to vector<1x8x32xf32>
    %23 = arith.mulf %22, %21 : vector<1x8x32xf32>
    %c0_12 = arith.constant 0 : index
    %c0_13 = arith.constant 0 : index
    %24 = vector.load %arg4[%c0_12, %c0_13] : memref<8x32xf32, #tpu.memory_space<vmem>>, vector<8x32xf32>
    %25 = arith.mulf %8, %23 : vector<1x8x32xf32>
    %26 = vector.shape_cast %24 : vector<8x32xf32> to vector<1x8x32xf32>
    %27 = arith.subf %26, %25 : vector<1x8x32xf32>
    %28 = vector.broadcast %23 : vector<1x8x32xf32> to vector<4x8x32xf32>
    %29 = arith.mulf %4, %28 : vector<4x8x32xf32>
    %30 = vector.broadcast %27 : vector<1x8x32xf32> to vector<4x8x32xf32>
    %31 = arith.addf %29, %30 : vector<4x8x32xf32>
    %cst_14 = arith.constant 0.000000e+00 : f32
    %32 = vector.broadcast %cst_14 : f32 to vector<4x8x32xf32>
    %33 = arith.cmpf oge, %31, %32 : vector<4x8x32xf32>
    %cst_15 = arith.constant 2.000000e-01 : f32
    %34 = vector.broadcast %cst_15 : f32 to vector<4x8x32xf32>
    %35 = arith.mulf %34, %31 : vector<4x8x32xf32>
    %36 = arith.select %33, %31, %35 : vector<4x8x32xi1>, vector<4x8x32xf32>
    %c0_16 = arith.constant 0 : index
    %c0_17 = arith.constant 0 : index
    %c0_18 = arith.constant 0 : index
    %37 = vector.load %arg5[%c0_16, %c0_17, %c0_18] : memref<4x8x32xf32, #tpu.memory_space<vmem>>, vector<4x8x32xf32>
    tpu.vector_store %arg5[%c0_16, %c0_17, %c0_18], %36 {strides = array<i32>} : memref<4x8x32xf32, #tpu.memory_space<vmem>>, vector<4x8x32xf32>,
    return
  }
  func.func @transform_0(%arg0: i32) -> (i32, i32, i32) {
    %c0_i32 = arith.constant 0 : i32
    %c0_i32_0 = arith.constant 0 : i32
    %c0_i32_1 = arith.constant 0 : i32
    return %c0_i32, %arg0, %c0_i32_0 : i32, i32, i32
  }
  func.func @transform_1(%arg0: i32) -> (i32, i32) {
    %c0_i32 = arith.constant 0 : i32
    %c0_i32_0 = arith.constant 0 : i32
    %c0_i32_1 = arith.constant 0 : i32
    return %c0_i32, %c0_i32_0 : i32, i32
  }
  func.func @transform_2(%arg0: i32) -> (i32, i32) {
    %c0_i32 = arith.constant 0 : i32
    %c0_i32_0 = arith.constant 0 : i32
    return %arg0, %c0_i32 : i32, i32
  }
  func.func @transform_3(%arg0: i32) -> (i32, i32) {
    %c0_i32 = arith.constant 0 : i32
    %c0_i32_0 = arith.constant 0 : i32
    return %arg0, %c0_i32 : i32, i32
  }
  func.func @transform_4(%arg0: i32) -> (i32, i32, i32) {
    %c0_i32 = arith.constant 0 : i32
    %c0_i32_0 = arith.constant 0 : i32
    %c0_i32_1 = arith.constant 0 : i32
    return %c0_i32, %arg0, %c0_i32_0 : i32, i32, i32
  }
}

</mosaic_0001>

<llo_original>
// kernel: tpu_custom_call.1
$region0: #{tpu_custom_call.1}
  #allocation0 [shape = 'u32[]', space=smem, size = 0x4, offset = 0x4, fixed_abs, tag = 'smem constant byte address 0x4 - core index']
  #allocation1 [shape = 'u32[144,128]{1,0:T(1,128)}', space=vmem, size = 0x12000, scoped, tag = 'internal scratch']
  %s0 = inlined_call_operand.vmem [shape: f32[4,10,35], index: 0, kind: input, shape index: {}]
  %s1 = inlined_call_operand.vmem [shape: f32[35,32], index: 1, kind: input, shape index: {}]
  %s2 = inlined_call_operand.vmem [shape: f32[10,32], index: 2, kind: input, shape index: {}]
  %s3 = inlined_call_operand.vmem [shape: f32[10,32], index: 3, kind: input, shape index: {}]
  %s4 = inlined_call_operand.vmem [shape: f32[4,10,32], index: 4, kind: output, shape index: {}]
  %s5 = sld [smem:[#allocation0]]
  $region121: #{tpu_custom_call.1} parent=0
    _
  %s7 = ssub.s32 1, %s5
  %s8 = scalar_select 0, %s7, %s5
  $region1: #{tpu_custom_call.1} parent=0
    #allocation2 [shape = 'u8[32768]{0}', space=vmem, size = 0x8000, scoped, tag = 'input window, operand 0']
    #allocation3 [shape = 'u8[32768]{0}', space=vmem, size = 0x8000, scoped, tag = 'output window, operand 0']
    loop: start=0, step=1, limit=4
    $region2: #{tpu_custom_call.1} parent=1 // loop_pre_header
      _
    $region3: #{tpu_custom_call.1} parent=1 // loop_header
      %s10 = sphi 0, %s14
      %p11 = scmp.ge.s32.totalorder %s10, 4
      %s20 = sphi 0, %s22
      %s23 = sphi 0, %s20
      %s24 = sphi 0, %s23
      %s40 = sphi 0, %s24
      %s44 = sphi 0, %s44
      %s46 = sphi 0, %s44
      %s47 = sphi 0, %s46
      %s61 = sphi 0, %s47
      %s67 = sphi 0, %s69
      %s70 = sphi 0, %s67
      %s71 = sphi 0, %s70
      %s87 = sphi 0, %s71
      %s93 = sphi 0, %s95
      %s96 = sphi 0, %s93
      %s97 = sphi 0, %s96
      %s113 = sphi 0, %s97
      %s119 = sphi 0, %s121
      %s122 = sphi 0, %s119
      %s123 = sphi 0, %s122
      %s139 = sphi 0, %s123
    $region4: #{tpu_custom_call.1} parent=1 // loop_header_branch
      %13 = sbr.rel (%p11) target = $region8
    $region5: #{tpu_custom_call.1} parent=1 // loop_body
      %s15 = ssub.s32 %s10, 1
      %s16 = ssub.s32 %s10, 2
      %s17 = sadd.s32 %s10, 1
      %s18 = ssub.s32 %s10, %s17
      %p19 = scmp.eq.s32.totalorder %s18, 0
      %s21 = sadd.s32 %s20, 1
      %s22 = scalar_select %p19, %s20, %s21
      %p25 = pneg %p19
      %p26 = scmp.eq.s32.totalorder %s10, 1
      %p27 = por %p25, %p26
      %p28 = scmp.ne.s32.totalorder %s20, %s23
      %p29 = scmp.eq.s32.totalorder %s10, 0
      %p30 = por %p28, %p29
      %p31 = scmp.ne.s32.totalorder %s20, %s23
      %p32 = scmp.eq.s32.totalorder %s15, 1
      %p33 = por %p31, %p32
      %p34 = scmp.ne.s32.totalorder %s23, %s24
      %p35 = scmp.eq.s32.totalorder %s15, 0
      %p36 = por %p34, %p35
      %p37 = scmp.ne.s32.totalorder %s23, %s24
      %p38 = scmp.eq.s32.totalorder %s16, 1
      %p39 = por %p37, %p38
      %p41 = scmp.ne.s32.totalorder %s24, %s40
      %p42 = scmp.eq.s32.totalorder %s16, 0
      %p43 = por %p41, %p42
      %s45 = sadd.s32 %s44, 1
      %p48 = scmp.eq.s32.totalorder %s10, 1
      %p49 = scmp.ne.s32.totalorder %s44, %s46
      %p50 = scmp.eq.s32.totalorder %s10, 0
      %p51 = por %p49, %p50
      %p52 = scmp.ne.s32.totalorder %s44, %s46
      %p53 = scmp.eq.s32.totalorder %s15, 1
      %p54 = por %p52, %p53
      %p55 = scmp.ne.s32.totalorder %s46, %s47
      %p56 = scmp.eq.s32.totalorder %s15, 0
      %p57 = por %p55, %p56
      %p58 = scmp.ne.s32.totalorder %s46, %s47
      %p59 = scmp.eq.s32.totalorder %s16, 1
      %p60 = por %p58, %p59
      %p62 = scmp.ne.s32.totalorder %s47, %s61
      %p63 = scmp.eq.s32.totalorder %s16, 0
      %p64 = por %p62, %p63
      %s65 = ssub.s32 %s10, %s17
      %p66 = scmp.eq.s32.totalorder %s65, 0
      %s68 = sadd.s32 %s67, 1
      %s69 = scalar_select %p66, %s67, %s68
      %p72 = pneg %p66
      %p73 = scmp.eq.s32.totalorder %s10, 1
      %p74 = por %p72, %p73
      %p75 = scmp.ne.s32.totalorder %s67, %s70
      %p76 = scmp.eq.s32.totalorder %s10, 0
      %p77 = por %p75, %p76
      %p78 = scmp.ne.s32.totalorder %s67, %s70
      %p79 = scmp.eq.s32.totalorder %s15, 1
      %p80 = por %p78, %p79
      %p81 = scmp.ne.s32.totalorder %s70, %s71
      %p82 = scmp.eq.s32.totalorder %s15, 0
      %p83 = por %p81, %p82
      %p84 = scmp.ne.s32.totalorder %s70, %s71
      %p85 = scmp.eq.s32.totalorder %s16, 1
      %p86 = por %p84, %p85
      %p88 = scmp.ne.s32.totalorder %s71, %s87
      %p89 = scmp.eq.s32.totalorder %s16, 0
      %p90 = por %p88, %p89
      %s91 = ssub.s32 %s10, %s17
      %p92 = scmp.eq.s32.totalorder %s91, 0
      %s94 = sadd.s32 %s93, 1
      %s95 = scalar_select %p92, %s93, %s94
      %p98 = pneg %p92
      %p99 = scmp.eq.s32.totalorder %s10, 1
      %p100 = por %p98, %p99
      %p101 = scmp.ne.s32.totalorder %s93, %s96
      %p102 = scmp.eq.s32.totalorder %s10, 0
      %p103 = por %p101, %p102
      %p104 = scmp.ne.s32.totalorder %s93, %s96
      %p105 = scmp.eq.s32.totalorder %s15, 1
      %p106 = por %p104, %p105
      %p107 = scmp.ne.s32.totalorder %s96, %s97
      %p108 = scmp.eq.s32.totalorder %s15, 0
      %p109 = por %p107, %p108
      %p110 = scmp.ne.s32.totalorder %s96, %s97
      %p111 = scmp.eq.s32.totalorder %s16, 1
      %p112 = por %p110, %p111
      %p114 = scmp.ne.s32.totalorder %s97, %s113
      %p115 = scmp.eq.s32.totalorder %s16, 0
      %p116 = por %p114, %p115
      %s117 = ssub.s32 %s10, %s17
      %p118 = scmp.eq.s32.totalorder %s117, 0
      %s120 = sadd.s32 %s119, 1
      %s121 = scalar_select %p118, %s119, %s120
      %p124 = pneg %p118
      %p125 = scmp.eq.s32.totalorder %s10, 1
      %p126 = por %p124, %p125
      %p127 = scmp.ne.s32.totalorder %s119, %s122
      %p128 = scmp.eq.s32.totalorder %s10, 0
      %p129 = por %p127, %p128
      %p130 = scmp.ne.s32.totalorder %s119, %s122
      %p131 = scmp.eq.s32.totalorder %s15, 1
      %p132 = por %p130, %p131
      %p133 = scmp.ne.s32.totalorder %s122, %s123
      %p134 = scmp.eq.s32.totalorder %s15, 0
      %p135 = por %p133, %p134
      %p136 = scmp.ne.s32.totalorder %s122, %s123
      %p137 = scmp.eq.s32.totalorder %s16, 1
      %p138 = por %p136, %p137
      %p140 = scmp.ne.s32.totalorder %s123, %s139
      %p141 = scmp.eq.s32.totalorder %s16, 0
      %p142 = por %p140, %p141
      %p143 = scmp.le.s32.totalorder 1, %s10
      %p144 = scmp.lt.s32.totalorder %s10, 3
      %p145 = pnand %p143, %p144
      %p146 = pneg %p145
      // Predicated region
      $region9: #{tpu_custom_call.1} parent=5 // pred_check
        _
      $region10: #{tpu_custom_call.1} parent=5 // pred_check_branch
        %148 = sbr.rel (%p145) target = $region12
      $region11: #{tpu_custom_call.1} parent=5 // pred_region
        %s149 = ssub.s32 %s10, 1
        // Predicated region
        $region13: #{tpu_custom_call.1} parent=11 // pred_check
          %p150 = pneg %p57
        $region14: #{tpu_custom_call.1} parent=11 // pred_check_branch
          %152 = sbr.rel (%p150) target = $region16
        $region15: #{tpu_custom_call.1} parent=11 // pred_region
          _
        $region16: #{tpu_custom_call.1} parent=11 // pred_fallthru
          _
      $region12: #{tpu_custom_call.1} parent=5 // pred_fallthru
        _
      %p153 = scmp.lt.s32.totalorder %s10, 2
      // Predicated region
      $region17: #{tpu_custom_call.1} parent=5 // pred_check
        %p154 = pneg %p153
      $region18: #{tpu_custom_call.1} parent=5 // pred_check_branch
        %156 = sbr.rel (%p154) target = $region20
      $region19: #{tpu_custom_call.1} parent=5 // pred_region
        // Predicated region
        $region21: #{tpu_custom_call.1} parent=19 // pred_check
          %p157 = pneg %p30
        $region22: #{tpu_custom_call.1} parent=19 // pred_check_branch
          %159 = sbr.rel (%p157) target = $region24
        $region23: #{tpu_custom_call.1} parent=19 // pred_region
          %s160 = sand.u32 %s20, 1
          %s161 = sand.u32 %s20, 1
          %s162 = smul.addr %s161, 32
          %s163 = scalar_lea.vmem [#allocation2], %s162
          %s164 = smul.addr %s10, 8
          %s165 = scalar_lea.vmem %s0, %s164
          // Predicated region
          $region25: #{tpu_custom_call.1} parent=23 // pred_check
            _
          $region26: #{tpu_custom_call.1} parent=23 // pred_check_branch
            %167 = sbr.rel (0) target = $region28
          $region27: #{tpu_custom_call.1} parent=23 // pred_region
            // Predicated region
            $region29: #{tpu_custom_call.1} parent=27 // pred_check
              _
            $region30: #{tpu_custom_call.1} parent=27 // pred_check_branch
              %169 = sbr.rel (0) target = $region32
            $region31: #{tpu_custom_call.1} parent=27 // pred_region
              // Predicated region
              $region44: #{tpu_custom_call.1} parent=31 // pred_check
                _
              $region45: #{tpu_custom_call.1} parent=31 // pred_check_branch
                %190 = sbr.rel (0) target = $region47
              $region46: #{tpu_custom_call.1} parent=31 // pred_region
                loop: start=0, step=1, limit=1
                $region48: #{tpu_custom_call.1} parent=46 // loop_pre_header
                  _
                $region49: #{tpu_custom_call.1} parent=46 // loop_header
                  %s192 = sphi 0, %s196
                  %p193 = scmp.ge.s32.totalorder %s192, 1
                  %s197 = sphi %s165, %s165
                  %s198 = sphi %s163, %s163
                $region50: #{tpu_custom_call.1} parent=46 // loop_header_branch
                  %195 = sbr.rel (%p193) target = $region54
                $region51: #{tpu_custom_call.1} parent=46 // loop_body
                  %v199 = vld [vmem:[%s197] sm:$0xff]
                  %200 = vst [vmem:[%s198] sm:$0xff] %v199
                  %v201 = vld [vmem:[%s197 + $0x10] sm:$0xff]
                  %202 = vst [vmem:[%s198 + $0x8] sm:$0xff] %v201
                  %v203 = vld [vmem:[%s197 + $0x20] sm:$0xff]
                  %204 = vst [vmem:[%s198 + $0x10] sm:$0xff] %v203
                  %v205 = vld [vmem:[%s197 + $0x30] sm:$0xff]
                  %206 = vst [vmem:[%s198 + $0x18] sm:$0xff] %v205
                $region52: #{tpu_custom_call.1} parent=46 // loop_footer
                  %s196 = sadd.s32 1, %s192
                $region53: #{tpu_custom_call.1} parent=46 // loop_footer_branch
                  %191 = sbr.rel target = $region49
                $region54: #{tpu_custom_call.1} parent=46 // loop_exit
                  _
              $region47: #{tpu_custom_call.1} parent=31 // pred_fallthru
                _
              // Predicated region
              $region55: #{tpu_custom_call.1} parent=31 // pred_check
                _
              $region56: #{tpu_custom_call.1} parent=31 // pred_check_branch
                %208 = sbr.rel target = $region58
              $region57: #{tpu_custom_call.1} parent=31 // pred_region
                _
              $region58: #{tpu_custom_call.1} parent=31 // pred_fallthru
                _
            $region32: #{tpu_custom_call.1} parent=27 // pred_fallthru
              _
            // Predicated region
            $region33: #{tpu_custom_call.1} parent=27 // pred_check
              _
            $region34: #{tpu_custom_call.1} parent=27 // pred_check_branch
              %171 = sbr.rel target = $region36
            $region35: #{tpu_custom_call.1} parent=27 // pred_region
              loop: start=0, step=1, limit=1
              $region37: #{tpu_custom_call.1} parent=35 // loop_pre_header
                _
              $region38: #{tpu_custom_call.1} parent=35 // loop_header
                %s174 = sphi 0, %s178
                %p175 = scmp.ge.s32.totalorder %s174, 1
                %s179 = sphi %s165, %s165
                %s180 = sphi %s163, %s163
              $region39: #{tpu_custom_call.1} parent=35 // loop_header_branch
                %177 = sbr.rel (%p175) target = $region43
              $region40: #{tpu_custom_call.1} parent=35 // loop_body
                %v181 = vld [vmem:[%s179] sm:$0xff]
                %182 = vst [vmem:[%s180] sm:$0xff] %v181
                %v183 = vld [vmem:[%s179 + $0x10] sm:$0xff]
                %184 = vst [vmem:[%s180 + $0x8] sm:$0xff] %v183
                %v185 = vld [vmem:[%s179 + $0x20] sm:$0xff]
                %186 = vst [vmem:[%s180 + $0x10] sm:$0xff] %v185
                %v187 = vld [vmem:[%s179 + $0x30] sm:$0xff]
                %188 = vst [vmem:[%s180 + $0x18] sm:$0xff] %v187
              $region41: #{tpu_custom_call.1} parent=35 // loop_footer
                %s178 = sadd.s32 1, %s174
              $region42: #{tpu_custom_call.1} parent=35 // loop_footer_branch
                %173 = sbr.rel target = $region38
              $region43: #{tpu_custom_call.1} parent=35 // loop_exit
                _
            $region36: #{tpu_custom_call.1} parent=27 // pred_fallthru
              _
          $region28: #{tpu_custom_call.1} parent=23 // pred_fallthru
            _
          %209 = vnop
        $region24: #{tpu_custom_call.1} parent=19 // pred_fallthru
          _
        // Predicated region
        $region59: #{tpu_custom_call.1} parent=19 // pred_check
          %p210 = pneg %p77
        $region60: #{tpu_custom_call.1} parent=19 // pred_check_branch
          %212 = sbr.rel (%p210) target = $region62
        $region61: #{tpu_custom_call.1} parent=19 // pred_region
          %p213 = scmp.lt.s32.totalorder %s10, 1
          %s214 = scalar_select %p213, %s10, 1
          %s215 = smul.addr %s214, 8
          %s216 = scalar_lea.vmem %s2, %s215
        $region62: #{tpu_custom_call.1} parent=19 // pred_fallthru
          _
        // Predicated region
        $region63: #{tpu_custom_call.1} parent=19 // pred_check
          %p217 = pneg %p103
        $region64: #{tpu_custom_call.1} parent=19 // pred_check_branch
          %219 = sbr.rel (%p217) target = $region66
        $region65: #{tpu_custom_call.1} parent=19 // pred_region
          %p220 = scmp.lt.s32.totalorder %s10, 1
          %s221 = scalar_select %p220, %s10, 1
          %s222 = smul.addr %s221, 8
          %s223 = scalar_lea.vmem %s3, %s222
        $region66: #{tpu_custom_call.1} parent=19 // pred_fallthru
          _
      $region20: #{tpu_custom_call.1} parent=5 // pred_fallthru
        _
      %p224 = scmp.le.s32.totalorder 1, %s10
      %p225 = scmp.lt.s32.totalorder %s10, 3
      %p226 = pnand %p224, %p225
      %p227 = pneg %p226
      // Predicated region
      $region67: #{tpu_custom_call.1} parent=5 // pred_check
        _
      $region68: #{tpu_custom_call.1} parent=5 // pred_check_branch
        %229 = sbr.rel (%p226) target = $region70
      $region69: #{tpu_custom_call.1} parent=5 // pred_region
        %s230 = ssub.s32 %s10, 1
        %s231 = sand.u32 %s23, 1
        %s232 = sand.u32 %s23, 1
        %s233 = smul.addr %s232, 32
        %s234 = scalar_lea.vmem [#allocation2], %s233
        // Predicated region
        $region71: #{tpu_custom_call.1} parent=69 // pred_check
          %p235 = pneg %p36
        $region72: #{tpu_custom_call.1} parent=69 // pred_check_branch
          %237 = sbr.rel (%p235) target = $region74
        $region73: #{tpu_custom_call.1} parent=69 // pred_region
          _
        $region74: #{tpu_custom_call.1} parent=69 // pred_fallthru
          _
        %s238 = sand.u32 %s23, 1
        %s239 = sand.u32 %s23, 1
        %s240 = smul.addr %s239, 32
        %s241 = scalar_lea.vmem [#allocation2], %s240
        %p242 = pneg %p36
        %p243 = pneg %p33
        %p244 = pneg %p57
        %p245 = pneg %p54
        %p246 = scmp.lt.s32.totalorder %s15, 1
        %s247 = scalar_select %p246, %s15, 1
        %s248 = smul.addr %s247, 8
        %s249 = scalar_lea.vmem %s2, %s248
        %p250 = pneg %p83
        %p251 = pneg %p80
        %p252 = scmp.lt.s32.totalorder %s15, 1
        %s253 = scalar_select %p252, %s15, 1
        %s254 = smul.addr %s253, 8
        %s255 = scalar_lea.vmem %s3, %s254
        %p256 = pneg %p109
        %p257 = pneg %p106
        %p258 = pneg %p135
        %p259 = pneg %p132
        %s260 = sand.u32 %s122, 1
        %s261 = sand.u32 %s122, 1
        %s262 = smul.addr %s261, 32
        %s263 = scalar_lea.vmem [#allocation3], %s262
        %p264 = scmp.lt.s32.totalorder %s15, 1
        %s265 = scalar_select %p264, %s15, 1
        %s266 = smul.addr %s265, 8
        %s267 = scalar_lea.vmem %s2, %s266
        %p268 = scmp.lt.s32.totalorder %s15, 1
        %s269 = scalar_select %p268, %s15, 1
        %s270 = smul.addr %s269, 8
        %s271 = scalar_lea.vmem %s3, %s270
        %v272 = vld [vmem:[%s234] sm:$0xff]
        %v273 = vld [vmem:[%s234 + $0x8] sm:$0xff]
        %v274 = vld [vmem:[%s234 + $0x10] sm:$0xff]
        %v275 = vld [vmem:[%s234 + $0x18] sm:$0xff]
        %v276 = vld [vmem:[%s1] sm:$0xff]
        %v277 = vld [vmem:[%s1 + $0x8] sm:$0xff]
        %v278 = vld [vmem:[%s1 + $0x10] sm:$0xff]
        %v279 = vld [vmem:[%s1 + $0x18] sm:$0xff]
        %v280 = vld [vmem:[%s1 + $0x20] sm:$0x7]
        %vm281 = vcmask 285696
        %v283 = vsel %vm281, %v272, 0
        %v286 = vsel %vm281, %v273, 0
        %v289 = vsel %vm281, %v274, 0
        %v292 = vsel %vm281, %v275, 0
        %vm294 = vcmask 1042432
        %v296 = vsel %vm294, %v280, 0
        %298 = vmatprep.subr.mxu0 0.0
        %299 = vmatpush1.msra.mxu0 %v276
        %300 = vmatprep.subr.mxu0 0.0
        %301 = vmatpush1.msra.mxu0 %v277
        %302 = vmatprep.subr.mxu0 0.0
        %303 = vmatpush1.msra.mxu0 %v278
        %304 = vmatprep.subr.mxu0 0.0
        %305 = vmatpush1.msra.mxu0 %v279
        %306 = vmatprep.subr.mxu0 0.0
        %307 = vmatpush1.msra.mxu0 %v296
        %308 = vmatprep.subr.mxu0 0.0
        %309 = vmatpush1.msra.mxu0 0.0
        %310 = vmatprep.subr.mxu0 0.0
        %311 = vmatpush1.msra.mxu0 0.0
        %312 = vmatprep.subr.mxu0 0.0
        %313 = vmatpush1.msra.mxu0 0.0
        %314 = vmatprep.subr.mxu0 0.0
        %315 = vmatpush1.msra.mxu0 0.0
        %316 = vmatprep.subr.mxu0 0.0
        %317 = vmatpush1.msra.mxu0 0.0
        %318 = vmatprep.subr.mxu0 0.0
        %319 = vmatpush1.msra.mxu0 0.0
        %320 = vmatprep.subr.mxu0 0.0
        %321 = vmatpush1.msra.mxu0 0.0
        %322 = vmatprep.subr.mxu0 0.0
        %323 = vmatpush1.msra.mxu0 0.0
        %324 = vmatprep.subr.mxu0 0.0
        %325 = vmatpush1.msra.mxu0 0.0
        %326 = vmatprep.subr.mxu0 0.0
        %327 = vmatpush1.msra.mxu0 0.0
        %328 = vmatprep.subr.mxu0 0.0
        %329 = vmatpush1.msra.mxu0 0.0
        %330 = vmatprep.subr.mxu0 0.0
        %331 = vmatpush1.msra.mxu0 0.0
        %332 = vmatprep.subr.mxu0 0.0
        %333 = vmatpush1.msra.mxu0 0.0
        %334 = vmatprep.subr.mxu0 0.0
        %335 = vmatpush1.msra.mxu0 0.0
        %336 = vmatprep.subr.mxu0 0.0
        %337 = vmatpush1.msra.mxu0 0.0
        %338 = vmatprep.subr.mxu0 0.0
        %339 = vmatpush1.msra.mxu0 0.0
        %340 = vmatprep.subr.mxu0 0.0
        %341 = vmatpush1.msra.mxu0 0.0
        %342 = vmatprep.subr.mxu0 0.0
        %343 = vmatpush1.msra.mxu0 0.0
        %344 = vmatprep.subr.mxu0 0.0
        %345 = vmatpush1.msra.mxu0 0.0
        %346 = vmatprep.subr.mxu0 0.0
        %347 = vmatpush1.msra.mxu0 0.0
        %348 = vmatprep.subr.mxu0 0.0
        %349 = vmatpush1.msra.mxu0 0.0
        %350 = vmatprep.subr.mxu0 0.0
        %351 = vmatpush1.msra.mxu0 0.0
        %352 = vmatprep.subr.mxu0 0.0
        %353 = vmatpush1.msra.mxu0 0.0
        %354 = vmatprep.subr.mxu0 0.0
        %355 = vmatpush1.msra.mxu0 0.0
        %356 = vmatprep.subr.mxu0 0.0
        %357 = vmatpush1.msra.mxu0 0.0
        %358 = vmatprep.subr.mxu0 0.0
        %359 = vmatpush1.msra.mxu0 0.0
        %360 = vmatprep.subr.mxu0 0.0
        %361 = vmatpush1.msra.mxu0 0.0
        %362 = vmatprep.mubr.f32.mxu0 0.0
        %363 = vmatmul.mubr.f32.gmra.mrb[0].mxu0 %v283
        %v364 = vpop.f32.mrb[0].mxu0
        %v365 = vadd.f32 0.0, %v364
        %v366 = vpop.f32.mrb[0].mxu0
        %367 = vmatprep.mubr.f32.mxu0 0.0
        %368 = vmatmul.mubr.f32.gmra.mrb[0].mxu0 %v286
        %v369 = vpop.f32.mrb[0].mxu0
        %v370 = vadd.f32 0.0, %v369
        %v371 = vpop.f32.mrb[0].mxu0
        %372 = vmatprep.mubr.f32.mxu0 0.0
        %373 = vmatmul.mubr.f32.gmra.mrb[0].mxu0 %v289
        %v374 = vpop.f32.mrb[0].mxu0
        %v375 = vadd.f32 0.0, %v374
        %v376 = vpop.f32.mrb[0].mxu0
        %377 = vmatprep.mubr.f32.mxu0 0.0
        %378 = vmatmul.mubr.f32.gmra.mrb[0].mxu0 %v292
        %v379 = vpop.f32.mrb[0].mxu0
        %v380 = vadd.f32 0.0, %v379
        %v381 = vpop.f32.mrb[0].mxu0
        %382 = vdwg.mxu0
        %vm383 = vcmask 261120
        %v384 = vsel %vm383, %v365, 0.0
        %v385 = vsel %vm383, %v370, 0.0
        %v386 = vadd.f32 %v384, %v385
        %v387 = vsel %vm383, %v375, 0.0
        %v388 = vadd.f32 %v386, %v387
        %v389 = vsel %vm383, %v380, 0.0
        %v390 = vadd.f32 %v388, %v389
        %v391 = vrcp.pop 4.0
        %v392 = vmul.f32 %v390, %v391
        %v393 = vmul.f32 %v365, %v365
        %v394 = vmul.f32 %v370, %v370
        %v395 = vmul.f32 %v375, %v375
        %v396 = vmul.f32 %v380, %v380
        %v397 = vsel %vm383, %v393, 0.0
        %v398 = vsel %vm383, %v394, 0.0
        %v399 = vadd.f32 %v397, %v398
        %v400 = vsel %vm383, %v395, 0.0
        %v401 = vadd.f32 %v399, %v400
        %v402 = vsel %vm383, %v396, 0.0
        %v403 = vadd.f32 %v401, %v402
        %v404 = vmul.f32 %v403, %v391
        %v405 = vmul.f32 %v392, %v392
        %v406 = vsub.f32 %v404, %v405
        %v407 = vmax.f32 %v406, 0.0
        %v408 = vld [vmem:[%s267] sm:$0xff]
        %v409 = vadd.f32 %v407, 1e-05
        %v410 = vrsqrt.pop %v409
        %v411 = vmul.f32 %v408, %v410
        %v412 = vld [vmem:[%s271] sm:$0xff]
        %v413 = vmul.f32 %v392, %v411
        %v414 = vsub.f32 %v412, %v413
        %v415 = vmul.f32 %v365, %v411
        %v416 = vmul.f32 %v370, %v411
        %v417 = vmul.f32 %v375, %v411
        %v418 = vmul.f32 %v380, %v411
        %v419 = vadd.f32 %v415, %v414
        %v420 = vadd.f32 %v416, %v414
        %v421 = vadd.f32 %v417, %v414
        %v422 = vadd.f32 %v418, %v414
        %vm423 = vcmp.ge.f32.partialorder %v419, 0.0
        %vm424 = vcmp.ge.f32.partialorder %v420, 0.0
        %vm425 = vcmp.ge.f32.partialorder %v421, 0.0
        %vm426 = vcmp.ge.f32.partialorder %v422, 0.0
        %v427 = vmul.f32 %v419, 0.2
        %v428 = vmul.f32 %v420, 0.2
        %v429 = vmul.f32 %v421, 0.2
        %v430 = vmul.f32 %v422, 0.2
        %v431 = vsel %vm423, %v419, %v427
        %v432 = vsel %vm424, %v420, %v428
        %v433 = vsel %vm425, %v421, %v429
        %v434 = vsel %vm426, %v422, %v430
        %435 = vst.msk [vmem:[%s263] sm:$0xff] %vm383, %v431
        %436 = vst.msk [vmem:[%s263 + $0x8] sm:$0xff] %vm383, %v432
        %437 = vst.msk [vmem:[%s263 + $0x10] sm:$0xff] %vm383, %v433
        %438 = vst.msk [vmem:[%s263 + $0x18] sm:$0xff] %vm383, %v434
        %s439 = sand.u32 %s122, 1
        %s440 = sand.u32 %s122, 1
        %s441 = smul.addr %s440, 32
        %s442 = scalar_lea.vmem [#allocation3], %s441
        // Predicated region
        $region75: #{tpu_custom_call.1} parent=69 // pred_check
          %p443 = pneg %p132
        $region76: #{tpu_custom_call.1} parent=69 // pred_check_branch
          %445 = sbr.rel (%p443) target = $region78
        $region77: #{tpu_custom_call.1} parent=69 // pred_region
          %s446 = smul.addr %s15, 8
          %s447 = scalar_lea.vmem %s4, %s446
          // Predicated region
          $region79: #{tpu_custom_call.1} parent=77 // pred_check
            _
          $region80: #{tpu_custom_call.1} parent=77 // pred_check_branch
            %449 = sbr.rel (0) target = $region82
          $region81: #{tpu_custom_call.1} parent=77 // pred_region
            // Predicated region
            $region83: #{tpu_custom_call.1} parent=81 // pred_check
              _
            $region84: #{tpu_custom_call.1} parent=81 // pred_check_branch
              %451 = sbr.rel (0) target = $region86
            $region85: #{tpu_custom_call.1} parent=81 // pred_region
              // Predicated region
              $region98: #{tpu_custom_call.1} parent=85 // pred_check
                _
              $region99: #{tpu_custom_call.1} parent=85 // pred_check_branch
                %472 = sbr.rel (0) target = $region101
              $region100: #{tpu_custom_call.1} parent=85 // pred_region
                loop: start=0, step=1, limit=1
                $region102: #{tpu_custom_call.1} parent=100 // loop_pre_header
                  _
                $region103: #{tpu_custom_call.1} parent=100 // loop_header
                  %s474 = sphi 0, %s478
                  %p475 = scmp.ge.s32.totalorder %s474, 1
                  %s479 = sphi %s442, %s442
                  %s480 = sphi %s447, %s447
                $region104: #{tpu_custom_call.1} parent=100 // loop_header_branch
                  %477 = sbr.rel (%p475) target = $region108
                $region105: #{tpu_custom_call.1} parent=100 // loop_body
                  %v481 = vld [vmem:[%s479] sm:$0xff]
                  %482 = vst [vmem:[%s480] sm:$0xff] %v481
                  %v483 = vld [vmem:[%s479 + $0x8] sm:$0xff]
                  %484 = vst [vmem:[%s480 + $0x10] sm:$0xff] %v483
                  %v485 = vld [vmem:[%s479 + $0x10] sm:$0xff]
                  %486 = vst [vmem:[%s480 + $0x20] sm:$0xff] %v485
                  %v487 = vld [vmem:[%s479 + $0x18] sm:$0xff]
                  %488 = vst [vmem:[%s480 + $0x30] sm:$0xff] %v487
                $region106: #{tpu_custom_call.1} parent=100 // loop_footer
                  %s478 = sadd.s32 1, %s474
                $region107: #{tpu_custom_call.1} parent=100 // loop_footer_branch
                  %473 = sbr.rel target = $region103
                $region108: #{tpu_custom_call.1} parent=100 // loop_exit
                  _
              $region101: #{tpu_custom_call.1} parent=85 // pred_fallthru
                _
              // Predicated region
              $region109: #{tpu_custom_call.1} parent=85 // pred_check
                _
              $region110: #{tpu_custom_call.1} parent=85 // pred_check_branch
                %490 = sbr.rel target = $region112
              $region111: #{tpu_custom_call.1} parent=85 // pred_region
                _
              $region112: #{tpu_custom_call.1} parent=85 // pred_fallthru
                _
            $region86: #{tpu_custom_call.1} parent=81 // pred_fallthru
              _
            // Predicated region
            $region87: #{tpu_custom_call.1} parent=81 // pred_check
              _
            $region88: #{tpu_custom_call.1} parent=81 // pred_check_branch
              %453 = sbr.rel target = $region90
            $region89: #{tpu_custom_call.1} parent=81 // pred_region
              loop: start=0, step=1, limit=1
              $region91: #{tpu_custom_call.1} parent=89 // loop_pre_header
                _
              $region92: #{tpu_custom_call.1} parent=89 // loop_header
                %s456 = sphi 0, %s460
                %p457 = scmp.ge.s32.totalorder %s456, 1
                %s461 = sphi %s442, %s442
                %s462 = sphi %s447, %s447
              $region93: #{tpu_custom_call.1} parent=89 // loop_header_branch
                %459 = sbr.rel (%p457) target = $region97
              $region94: #{tpu_custom_call.1} parent=89 // loop_body
                %v463 = vld [vmem:[%s461] sm:$0xff]
                %464 = vst [vmem:[%s462] sm:$0xff] %v463
                %v465 = vld [vmem:[%s461 + $0x8] sm:$0xff]
                %466 = vst [vmem:[%s462 + $0x10] sm:$0xff] %v465
                %v467 = vld [vmem:[%s461 + $0x10] sm:$0xff]
                %468 = vst [vmem:[%s462 + $0x20] sm:$0xff] %v467
                %v469 = vld [vmem:[%s461 + $0x18] sm:$0xff]
                %470 = vst [vmem:[%s462 + $0x30] sm:$0xff] %v469
              $region95: #{tpu_custom_call.1} parent=89 // loop_footer
                %s460 = sadd.s32 1, %s456
              $region96: #{tpu_custom_call.1} parent=89 // loop_footer_branch
                %455 = sbr.rel target = $region92
              $region97: #{tpu_custom_call.1} parent=89 // loop_exit
                _
            $region90: #{tpu_custom_call.1} parent=81 // pred_fallthru
              _
          $region82: #{tpu_custom_call.1} parent=77 // pred_fallthru
            _
          %491 = vnop
        $region78: #{tpu_custom_call.1} parent=69 // pred_fallthru
          _
      $region70: #{tpu_custom_call.1} parent=5 // pred_fallthru
        _
      %p492 = scmp.le.s32.totalorder 2, %s10
      // Predicated region
      $region113: #{tpu_custom_call.1} parent=5 // pred_check
        %p493 = pneg %p492
      $region114: #{tpu_custom_call.1} parent=5 // pred_check_branch
        %495 = sbr.rel (%p493) target = $region116
      $region115: #{tpu_custom_call.1} parent=5 // pred_region
        %s496 = ssub.s32 %s10, 2
        // Predicated region
        $region117: #{tpu_custom_call.1} parent=115 // pred_check
          %p497 = pneg %p138
        $region118: #{tpu_custom_call.1} parent=115 // pred_check_branch
          %499 = sbr.rel (%p497) target = $region120
        $region119: #{tpu_custom_call.1} parent=115 // pred_region
          %s500 = sand.u32 %s123, 1
          %s501 = sand.u32 %s123, 1
          %s502 = smul.addr %s501, 32
          %s503 = scalar_lea.vmem [#allocation3], %s502
        $region120: #{tpu_custom_call.1} parent=115 // pred_fallthru
          _
      $region116: #{tpu_custom_call.1} parent=5 // pred_fallthru
        _
    $region6: #{tpu_custom_call.1} parent=1 // loop_footer
      %s14 = sadd.s32 1, %s10
    $region7: #{tpu_custom_call.1} parent=1 // loop_footer_branch
      %9 = sbr.rel target = $region3
    $region8: #{tpu_custom_call.1} parent=1 // loop_exit
      _

</llo_original>
